<compile_context>
chip_gen: v5e
topology: v5e:2x2
jax: 0.10.0
libtpu: 0.0.40
codegen_flags: <defaults>
</compile_context>

<pallas_src>
import jax
import jax.numpy as jnp
from jax.experimental import pallas as pl
from jax.experimental.pallas import tpu as pltpu

_MAX_TB = 16                      # static unroll bound for the in-kernel batch loop
_VMEM_BUDGET = 12 * 1024 * 1024   # double-buffered pipeline footprint cap (v5e-safe)


def _netc1_kernel(x_ref, w1_ref, w2_ref, b2_ref, tc_ref, ce_ref):
    # x_ref : (tB, d, tl)  lane axis = sequence/position axis L
    # w1_ref: (ndf, d)     trunk conv weight (VMEM-resident across grid)
    # w2_ref: (nc, ndf)    head  conv weight (VMEM-resident across grid)
    # b2_ref: (nc, 1)      head  conv bias   (broadcast over lanes)
    w1 = w1_ref[...]
    w2 = w2_ref[...]
    b2 = b2_ref[...]
    tB = x_ref.shape[0]
    for b in range(tB):  # static unroll, tB <= _MAX_TB
        x = x_ref[b]  # (d, tl)
        # trunk: Conv1d(d, ndf, k=1, bias=False)  ==  W1 @ x
        tc = jnp.dot(w1, x, preferred_element_type=jnp.float32)  # (ndf, tl)
        tc_ref[b] = tc.astype(tc_ref.dtype)
        # head: LeakyReLU(0.2) then Conv1d(ndf, nc, k=1, bias=True)
        h = jnp.maximum(tc, 0.2 * tc)  # LeakyReLU on the f32 accumulator
        ce = jnp.dot(w2, h, preferred_element_type=jnp.float32) + b2  # (nc, tl)
        ce_ref[b] = ce.astype(ce_ref.dtype)


def _largest_divisor_leq(n, cap):
    cap = int(max(1, min(n, cap)))
    for c in range(cap, 0, -1):
        if n % c == 0:
            return c
    return 1


def _num_tensorcores():
    # v7x has 2 TensorCores per chip; v5e/v6e have 1.  Detection failure
    # defaults to 1 (never force-split the grid on single-core chips).
    try:
        kind = jax.devices()[0].device_kind.lower()
    except Exception:
        return 1
    return 2 if ("v7" in kind or "7x" in kind) else 1


def _pick_tiles(B, L, d, ndf, nc, in_isize, out_isize, n_cores):
    """Pick (tB, tl) so the double-buffered pipeline footprint stays under
    _VMEM_BUDGET, per-step HBM traffic is as large as possible, and dual-TC
    chips (v7x) still get >= 2 grid steps per core when feasible."""
    col_bytes = 2 * (d * in_isize + (ndf + nc) * out_isize)  # per (b, l) column
    max_cols = max(1, _VMEM_BUDGET // col_bytes)

    tB = _largest_divisor_leq(B, min(_MAX_TB, max_cols))

    if L % 128 == 0:
        # Ensure at least a 128-wide lane tile fits next to tB.
        if tB * 128 > max_cols:
            tB = _largest_divisor_leq(B, max(1, max_cols // 128))
        tl = 128
        cap = min(L, max(128, (max_cols // max(1, tB)) // 128 * 128))
        for cand in range(128, cap + 1, 128):
            if L % cand == 0:
                tl = cand
    else:
        # (8,128) rule: a non-128-multiple lane dim must be taken whole.
        tl = L
        tB = _largest_divisor_leq(B, min(tB, max(1, max_cols // max(1, L))))

    # Dual-TensorCore (v7x): keep >= 2 steps per core when the problem allows.
    if n_cores > 1:
        while (B // tB) * (L // tl) < 2 * n_cores:
            if tB > 1:
                tB = _largest_divisor_leq(B, tB - 1)
            elif L % 128 == 0 and tl % 256 == 0:
                tl //= 2
            else:
                break
    return tB, tl


def netc1_forward(x_ncl, w1, w2, b2, out_dtype=None):
    """GOAD netC1 forward.
    x_ncl: (B, d, L); w1: (ndf, d); w2: (nc, ndf); b2: (nc,).
    Returns (tc, ce) in NCL layout: (B, ndf, L), (B, nc, L)."""
    B, d, L = x_ncl.shape
    ndf = w1.shape[0]
    nc = w2.shape[0]
    out_dtype = jnp.dtype(x_ncl.dtype if out_dtype is None else out_dtype)
    in_isize = jnp.dtype(x_ncl.dtype).itemsize
    out_isize = out_dtype.itemsize

    tB, tl = _pick_tiles(B, L, d, ndf, nc, in_isize, out_isize, _num_tensorcores())
    grid = (B // tB, L // tl)
    b2_col = b2.reshape(nc, 1)

    flops = 2 * B * L * (d * ndf + ndf * nc) + 2 * B * L * ndf
    bytes_accessed = (B * d * L * in_isize
                      + B * (ndf + nc) * L * out_isize
                      + (ndf * d + nc * ndf) * jnp.dtype(w1.dtype).itemsize
                      + nc * jnp.dtype(b2.dtype).itemsize)

    tc, ce = pl.pallas_call(
        _netc1_kernel,
        out_shape=(
            jax.ShapeDtypeStruct((B, ndf, L), out_dtype),
            jax.ShapeDtypeStruct((B, nc, L), out_dtype),
        ),
        grid=grid,
        in_specs=[
            pl.BlockSpec((tB, d, tl), lambda i, j: (i, 0, j)),
            pl.BlockSpec((ndf, d), lambda i, j: (0, 0)),
            pl.BlockSpec((nc, ndf), lambda i, j: (0, 0)),
            pl.BlockSpec((nc, 1), lambda i, j: (0, 0)),
        ],
        out_specs=(
            pl.BlockSpec((tB, ndf, tl), lambda i, j: (i, 0, j)),
            pl.BlockSpec((tB, nc, tl), lambda i, j: (i, 0, j)),
        ),
        compiler_params=pltpu.CompilerParams(
            dimension_semantics=("parallel", "parallel"),
        ),
        cost_estimate=pl.CostEstimate(
            flops=int(flops),
            transcendentals=0,
            bytes_accessed=int(bytes_accessed),
        ),
    )(x_ncl, w1, w2, b2_col)
    return tc, ce


def _reference(x, w1, w2, b2):
    tc = jnp.einsum("od,bdl->bol", w1, x)
    h = jnp.where(tc > 0, tc, 0.2 * tc)
    ce = jnp.einsum("co,bol->bcl", w2, h) + b2[None, :, None]
    return tc, ce


if __name__ == "__main__":
    ndf, nc, d = 32, 8, 16
    key = jax.random.PRNGKey(0)
    kx, kw1, kw2, kb2, kx2 = jax.random.split(key, 5)

    fwd = jax.jit(netc1_forward)

    w1 = jax.random.normal(kw1, (ndf, d), dtype=jnp.float32) * 0.1   # trunk weight
    w2 = jax.random.normal(kw2, (nc, ndf), dtype=jnp.float32) * 0.1  # head weight
    b2 = jax.random.normal(kb2, (nc,), dtype=jnp.float32) * 0.1      # head bias

    # Case 1: GOAD-small shapes (L not a multiple of 128 -> full-L lane tile,
    # batch amortized inside one grid step).
    B, L = 2, 8
    x = jax.random.normal(kx, (B, d, L), dtype=jnp.float32)
    tc, ce = fwd(x, w1, w2, b2)
    jax.block_until_ready((tc, ce))
    tc_ref, ce_ref = _reference(x, w1, w2, b2)
    assert tc.shape == (B, ndf, L) and ce.shape == (B, nc, L)
    assert jnp.allclose(tc, tc_ref, atol=1e-5), "tc mismatch (small L)"
    assert jnp.allclose(ce, ce_ref, atol=1e-5), "ce mismatch (small L)"

    # Case 2: lane-dense tiled path (L multiple of 128, batch-tiled grid).
    B2, L2 = 4, 256
    x2 = jax.random.normal(kx2, (B2, d, L2), dtype=jnp.float32)
    tc2, ce2 = fwd(x2, w1, w2, b2)
    jax.block_until_ready((tc2, ce2))
    tc2_ref, ce2_ref = _reference(x2, w1, w2, b2)
    assert jnp.allclose(tc2, tc2_ref, atol=1e-5), "tc mismatch (tiled L)"
    assert jnp.allclose(ce2, ce2_ref, atol=1e-5), "ce mismatch (tiled L)"

    # Case 3: bf16 HBM I/O (halves bytes); f32 accumulation stays in-kernel.
    xb = x2.astype(jnp.bfloat16)
    w1b = w1.astype(jnp.bfloat16)
    w2b = w2.astype(jnp.bfloat16)
    tcb, ceb = fwd(xb, w1b, w2b, b2)
    jax.block_until_ready((tcb, ceb))
    tcb_ref, ceb_ref = _reference(xb.astype(jnp.float32),
                                  w1b.astype(jnp.float32),
                                  w2b.astype(jnp.float32), b2)
    assert tcb.dtype == jnp.bfloat16 and ceb.dtype == jnp.bfloat16
    assert jnp.allclose(tcb.astype(jnp.float32), tcb_ref, atol=2e-2), "tc mismatch (bf16)"
    assert jnp.allclose(ceb.astype(jnp.float32), ceb_ref, atol=2e-2), "ce mismatch (bf16)"

    print("KERNEL_OK")
</pallas_src>

<mosaic_0001>
module attributes {stable_mosaic.version = 11 : i64} {
  func.func @_netc1_kernel(%arg0: i32, %arg1: i32, %arg2: memref<2x16x8xf32, #tpu.memory_space<vmem>>, %arg3: memref<32x16xf32, #tpu.memory_space<vmem>>, %arg4: memref<8x32xf32, #tpu.memory_space<vmem>>, %arg5: memref<8x1xf32, #tpu.memory_space<vmem>>, %arg6: memref<2x32x8xf32, #tpu.memory_space<vmem>>, %arg7: memref<2x8x8xf32, #tpu.memory_space<vmem>>) attributes {dimension_semantics = [#tpu.dimension_semantics<parallel>, #tpu.dimension_semantics<parallel>], iteration_bounds = array<i64: 1, 1>, scalar_prefetch = 0 : i64, scratch_operands = 0 : i64, tpu.core_type = #tpu.core_type<tc>, window_params = [{transform_indices = @transform_0, window_bounds = array<i64: 2, 16, 8>}, {pipeline_mode = #tpu.pipeline_mode<synchronous>, transform_indices = @transform_1, window_bounds = array<i64: 32, 16>}, {pipeline_mode = #tpu.pipeline_mode<synchronous>, transform_indices = @transform_2, window_bounds = array<i64: 8, 32>}, {pipeline_mode = #tpu.pipeline_mode<synchronous>, transform_indices = @transform_3, window_bounds = array<i64: 8, 1>}, {transform_indices = @transform_4, window_bounds = array<i64: 2, 32, 8>}, {transform_indices = @transform_5, window_bounds = array<i64: 2, 8, 8>}]} {
    %c0 = arith.constant 0 : index
    %c0_0 = arith.constant 0 : index
    %0 = vector.load %arg3[%c0, %c0_0] : memref<32x16xf32, #tpu.memory_space<vmem>>, vector<32x16xf32>
    %c0_1 = arith.constant 0 : index
    %c0_2 = arith.constant 0 : index
    %1 = vector.load %arg4[%c0_1, %c0_2] : memref<8x32xf32, #tpu.memory_space<vmem>>, vector<8x32xf32>
    %c0_3 = arith.constant 0 : index
    %c0_4 = arith.constant 0 : index
    %2 = vector.load %arg5[%c0_3, %c0_4] : memref<8x1xf32, #tpu.memory_space<vmem>>, vector<8x1xf32>
    %c0_5 = arith.constant 0 : index
    %c0_6 = arith.constant 0 : index
    %c0_7 = arith.constant 0 : index
    %3 = vector.load %arg2[%c0_5, %c0_6, %c0_7] : memref<2x16x8xf32, #tpu.memory_space<vmem>>, vector<1x16x8xf32>
    %4 = vector.shape_cast %3 : vector<1x16x8xf32> to vector<16x8xf32>
    %cst = arith.constant dense<0.000000e+00> : vector<32x8xf32>
    %5 = tpu.matmul %0, %4, %cst {dimension_numbers = #tpu.dot_dimension_numbers<[1], [0], [0], [1], [0, 0, 1, 1], [], []>} : vector<32x16xf32>, vector<16x8xf32>, vector<32x8xf32> -> vector<32x8xf32>
    %c0_8 = arith.constant 0 : index
    %c0_9 = arith.constant 0 : index
    %c0_10 = arith.constant 0 : index
    %6 = vector.load %arg6[%c0_8, %c0_9, %c0_10] : memref<2x32x8xf32, #tpu.memory_space<vmem>>, vector<1x32x8xf32>
    %7 = vector.shape_cast %6 : vector<1x32x8xf32> to vector<32x8xf32>
    %8 = vector.shape_cast %5 : vector<32x8xf32> to vector<1x32x8xf32>
    tpu.vector_store %arg6[%c0_8, %c0_9, %c0_10], %8 {strides = array<i32>} : memref<2x32x8xf32, #tpu.memory_space<vmem>>, vector<1x32x8xf32>,
    %cst_11 = arith.constant 2.000000e-01 : f32
    %9 = vector.broadcast %cst_11 : f32 to vector<32x8xf32>
    %10 = arith.mulf %9, %5 : vector<32x8xf32>
    %11 = arith.maximumf %5, %10 : vector<32x8xf32>
    %cst_12 = arith.constant dense<0.000000e+00> : vector<8x8xf32>
    %12 = tpu.matmul %1, %11, %cst_12 {dimension_numbers = #tpu.dot_dimension_numbers<[1], [0], [0], [1], [0, 0, 1, 1], [], []>} : vector<8x32xf32>, vector<32x8xf32>, vector<8x8xf32> -> vector<8x8xf32>
    %13 = vector.broadcast %2 : vector<8x1xf32> to vector<8x8xf32>
    %14 = arith.addf %12, %13 : vector<8x8xf32>
    %c0_13 = arith.constant 0 : index
    %c0_14 = arith.constant 0 : index
    %c0_15 = arith.constant 0 : index
    %15 = vector.load %arg7[%c0_13, %c0_14, %c0_15] : memref<2x8x8xf32, #tpu.memory_space<vmem>>, vector<1x8x8xf32>
    %16 = vector.shape_cast %15 : vector<1x8x8xf32> to vector<8x8xf32>
    %17 = vector.shape_cast %14 : vector<8x8xf32> to vector<1x8x8xf32>
    tpu.vector_store %arg7[%c0_13, %c0_14, %c0_15], %17 {strides = array<i32>} : memref<2x8x8xf32, #tpu.memory_space<vmem>>, vector<1x8x8xf32>,
    %c1 = arith.constant 1 : index
    %c0_16 = arith.constant 0 : index
    %c0_17 = arith.constant 0 : index
    %18 = vector.load %arg2[%c1, %c0_16, %c0_17] : memref<2x16x8xf32, #tpu.memory_space<vmem>>, vector<1x16x8xf32>
    %19 = vector.shape_cast %18 : vector<1x16x8xf32> to vector<16x8xf32>
    %cst_18 = arith.constant dense<0.000000e+00> : vector<32x8xf32>
    %20 = tpu.matmul %0, %19, %cst_18 {dimension_numbers = #tpu.dot_dimension_numbers<[1], [0], [0], [1], [0, 0, 1, 1], [], []>} : vector<32x16xf32>, vector<16x8xf32>, vector<32x8xf32> -> vector<32x8xf32>
    %c1_19 = arith.constant 1 : index
    %c0_20 = arith.constant 0 : index
    %c0_21 = arith.constant 0 : index
    %21 = vector.load %arg6[%c1_19, %c0_20, %c0_21] : memref<2x32x8xf32, #tpu.memory_space<vmem>>, vector<1x32x8xf32>
    %22 = vector.shape_cast %21 : vector<1x32x8xf32> to vector<32x8xf32>
    %23 = vector.shape_cast %20 : vector<32x8xf32> to vector<1x32x8xf32>
    tpu.vector_store %arg6[%c1_19, %c0_20, %c0_21], %23 {strides = array<i32>} : memref<2x32x8xf32, #tpu.memory_space<vmem>>, vector<1x32x8xf32>,
    %cst_22 = arith.constant 2.000000e-01 : f32
    %24 = vector.broadcast %cst_22 : f32 to vector<32x8xf32>
    %25 = arith.mulf %24, %20 : vector<32x8xf32>
    %26 = arith.maximumf %20, %25 : vector<32x8xf32>
    %cst_23 = arith.constant dense<0.000000e+00> : vector<8x8xf32>
    %27 = tpu.matmul %1, %26, %cst_23 {dimension_numbers = #tpu.dot_dimension_numbers<[1], [0], [0], [1], [0, 0, 1, 1], [], []>} : vector<8x32xf32>, vector<32x8xf32>, vector<8x8xf32> -> vector<8x8xf32>
    %28 = vector.broadcast %2 : vector<8x1xf32> to vector<8x8xf32>
    %29 = arith.addf %27, %28 : vector<8x8xf32>
    %c1_24 = arith.constant 1 : index
    %c0_25 = arith.constant 0 : index
    %c0_26 = arith.constant 0 : index
    %30 = vector.load %arg7[%c1_24, %c0_25, %c0_26] : memref<2x8x8xf32, #tpu.memory_space<vmem>>, vector<1x8x8xf32>
    %31 = vector.shape_cast %30 : vector<1x8x8xf32> to vector<8x8xf32>
    %32 = vector.shape_cast %29 : vector<8x8xf32> to vector<1x8x8xf32>
    tpu.vector_store %arg7[%c1_24, %c0_25, %c0_26], %32 {strides = array<i32>} : memref<2x8x8xf32, #tpu.memory_space<vmem>>, vector<1x8x8xf32>,
    return
  }
  func.func @transform_0(%arg0: i32, %arg1: i32) -> (i32, i32, i32) {
    %c0_i32 = arith.constant 0 : i32
    %c0_i32_0 = arith.constant 0 : i32
    return %arg0, %c0_i32, %arg1 : i32, i32, i32
  }
  func.func @transform_1(%arg0: i32, %arg1: i32) -> (i32, i32) {
    %c0_i32 = arith.constant 0 : i32
    %c0_i32_0 = arith.constant 0 : i32
    %c0_i32_1 = arith.constant 0 : i32
    return %c0_i32, %c0_i32_0 : i32, i32
  }
  func.func @transform_2(%arg0: i32, %arg1: i32) -> (i32, i32) {
    %c0_i32 = arith.constant 0 : i32
    %c0_i32_0 = arith.constant 0 : i32
    %c0_i32_1 = arith.constant 0 : i32
    return %c0_i32, %c0_i32_0 : i32, i32
  }
  func.func @transform_3(%arg0: i32, %arg1: i32) -> (i32, i32) {
    %c0_i32 = arith.constant 0 : i32
    %c0_i32_0 = arith.constant 0 : i32
    %c0_i32_1 = arith.constant 0 : i32
    return %c0_i32, %c0_i32_0 : i32, i32
  }
  func.func @transform_4(%arg0: i32, %arg1: i32) -> (i32, i32, i32) {
    %c0_i32 = arith.constant 0 : i32
    %c0_i32_0 = arith.constant 0 : i32
    return %arg0, %c0_i32, %arg1 : i32, i32, i32
  }
  func.func @transform_5(%arg0: i32, %arg1: i32) -> (i32, i32, i32) {
    %c0_i32 = arith.constant 0 : i32
    %c0_i32_0 = arith.constant 0 : i32
    return %arg0, %c0_i32, %arg1 : i32, i32, i32
  }
}

</mosaic_0001>

<llo_original>
// kernel: netc1_forward.1
$region0: #{netc1_forward.1}
  #allocation0 [shape = 'u32[]', space=smem, size = 0x4, offset = 0x4, fixed_abs, tag = 'smem constant byte address 0x4 - core index']
  #allocation1 [shape = 'u32[72,128]{1,0:T(1,128)}', space=vmem, size = 0x9000, scoped, tag = 'internal scratch']
  %s0 = inlined_call_operand.vmem [shape: f32[2,16,8], index: 0, kind: input, shape index: {}]
  %s1 = inlined_call_operand.vmem [shape: f32[32,16], index: 1, kind: input, shape index: {}]
  %s2 = inlined_call_operand.vmem [shape: f32[8,32], index: 2, kind: input, shape index: {}]
  %s3 = inlined_call_operand.vmem [shape: f32[8,1], index: 3, kind: input, shape index: {}]
  %s4 = inlined_call_operand.vmem [shape: f32[2,32,8], index: 4, kind: output, shape index: {0}]
  %s5 = inlined_call_operand.hbm [shape: f32[2,8,8], index: 5, kind: output, shape index: {1}]
  %6 = xla_tuple %s4, %s5
  %s7 = sld [smem:[#allocation0]]
  $region34: #{netc1_forward.1} parent=0
    _
  %s9 = ssub.s32 1, %s7
  %s10 = scalar_select 0, %s9, %s7
  $region1: #{netc1_forward.1} parent=0
    #allocation2 [shape = 'u8[8192]{0}', space=vmem, size = 0x2000, scoped, tag = 'output window, operand 1, single buffered']
    #allocation3 [shape = 's32[1]{0}', space=sflag, size = 0x4, scoped, tag = 'scoped memory for netc1_forward.1']
    %11 = vsyncpa [#allocation3], 0
    // Predicated region
    $region2: #{netc1_forward.1} parent=1 // pred_check
      _
    $region3: #{netc1_forward.1} parent=1 // pred_check_branch
      %13 = sbr.rel (0) target = $region5
    $region4: #{netc1_forward.1} parent=1 // pred_region
      _
    $region5: #{netc1_forward.1} parent=1 // pred_fallthru
      _
    // Predicated region
    $region6: #{netc1_forward.1} parent=1 // pred_check
      _
    $region7: #{netc1_forward.1} parent=1 // pred_check_branch
      %15 = sbr.rel (0) target = $region9
    $region8: #{netc1_forward.1} parent=1 // pred_region
      _
    $region9: #{netc1_forward.1} parent=1 // pred_fallthru
      _
    // Predicated region
    $region10: #{netc1_forward.1} parent=1 // pred_check
      _
    $region11: #{netc1_forward.1} parent=1 // pred_check_branch
      %17 = sbr.rel (0) target = $region13
    $region12: #{netc1_forward.1} parent=1 // pred_region
      _
    $region13: #{netc1_forward.1} parent=1 // pred_fallthru
      _
    // Predicated region
    $region14: #{netc1_forward.1} parent=1 // pred_check
      _
    $region15: #{netc1_forward.1} parent=1 // pred_check_branch
      %19 = sbr.rel (0) target = $region17
    $region16: #{netc1_forward.1} parent=1 // pred_region
      _
    $region17: #{netc1_forward.1} parent=1 // pred_fallthru
      _
    %v20 = vld [vmem:[%s1] sm:$0xff]
    %v21 = vld [vmem:[%s1 + $0x8] sm:$0xff]
    %v22 = vld [vmem:[%s1 + $0x10] sm:$0xff]
    %v23 = vld [vmem:[%s1 + $0x18] sm:$0xff]
    %v24 = vld [vmem:[%s2] sm:$0xff]
    %v25 = vld [vmem:[%s3] sm:$0xff]
    %v26 = vld [vmem:[%s0] sm:$0xff]
    %v27 = vld [vmem:[%s0 + $0x8] sm:$0xff]
    %vm28 = vcmask 130048
    %v30 = vsel %vm28, %v20, 0
    %v33 = vsel %vm28, %v21, 0
    %v36 = vsel %vm28, %v22, 0
    %v39 = vsel %vm28, %v23, 0
    %41 = vmatpush.msra.mxu0 0.0
    %42 = vmatpush.msra.mxu0 0.0
    %43 = vmatpush.msra.mxu0 0.0
    %44 = vmatpush.msra.mxu0 0.0
    %45 = vmatpush.msra.mxu0 0.0
    %46 = vmatpush.msra.mxu0 0.0
    %47 = vmatpush.msra.mxu0 0.0
    %48 = vmatpush.msra.mxu0 0.0
    %49 = vmatpush.msra.mxu0 0.0
    %50 = vmatpush.msra.mxu0 0.0
    %51 = vmatpush.msra.mxu0 0.0
    %52 = vmatpush.msra.mxu0 0.0
    %53 = vmatpush.msra.mxu0 0.0
    %54 = vmatpush.msra.mxu0 0.0
    %55 = vmatpush.msra.mxu0 %v27
    %56 = vmatpush.msra.mxu0 %v26
    %57 = vmatmul.f32.gmra.mxu0 %v30
    %v58 = vpop.f32.mrf.mxu0
    %v59 = vadd.f32 0.0, %v58
    %60 = vmatmul.f32.gmra.mxu0 %v33
    %v61 = vpop.f32.mrf.mxu0
    %v62 = vadd.f32 0.0, %v61
    %63 = vmatmul.f32.gmra.mxu0 %v36
    %v64 = vpop.f32.mrf.mxu0
    %v65 = vadd.f32 0.0, %v64
    %66 = vmatmul.f32.gmra.mxu0 %v39
    %v67 = vpop.f32.mrf.mxu0
    %v68 = vadd.f32 0.0, %v67
    %69 = vdwg.mxu0
    %vm70 = vcmask 64512
    %71 = vst.msk [vmem:[%s4] sm:$0xff] %vm70, %v59
    %72 = vst.msk [vmem:[%s4 + $0x8] sm:$0xff] %vm70, %v62
    %73 = vst.msk [vmem:[%s4 + $0x10] sm:$0xff] %vm70, %v65
    %74 = vst.msk [vmem:[%s4 + $0x18] sm:$0xff] %vm70, %v68
    %v75 = vmul.f32 %v59, 0.2
    %v76 = vmul.f32 %v62, 0.2
    %v77 = vmul.f32 %v65, 0.2
    %v78 = vmul.f32 %v68, 0.2
    %v79 = vmax.f32 %v59, %v75
    %v80 = vmax.f32 %v62, %v76
    %v81 = vmax.f32 %v65, %v77
    %v82 = vmax.f32 %v68, %v78
    %84 = vset.pattern.permute.xlu0 0
    %85 = vperm.xlu0 %84, %v25
    %v86 = vpop.permute.xlu0 %85
    %vm88 = vcmask 261120
    %v90 = vsel %vm88, %v24, 0
    %92 = vmatpush.msra.mxu0 0.0
    %93 = vmatpush.msra.mxu0 0.0
    %94 = vmatpush.msra.mxu0 0.0
    %95 = vmatpush.msra.mxu0 0.0
    %96 = vmatpush.msra.mxu0 0.0
    %97 = vmatpush.msra.mxu0 0.0
    %98 = vmatpush.msra.mxu0 0.0
    %99 = vmatpush.msra.mxu0 0.0
    %100 = vmatpush.msra.mxu0 0.0
    %101 = vmatpush.msra.mxu0 0.0
    %102 = vmatpush.msra.mxu0 0.0
    %103 = vmatpush.msra.mxu0 0.0
    %104 = vmatpush.msra.mxu0 %v82
    %105 = vmatpush.msra.mxu0 %v81
    %106 = vmatpush.msra.mxu0 %v80
    %107 = vmatpush.msra.mxu0 %v79
    %108 = vmatmul.f32.gmra.mxu0 %v90
    %v109 = vpop.f32.mrf.mxu0
    %v110 = vadd.f32 %v86, %v109
    %111 = vdwg.mxu0
    %112 = vst.msk [vmem:[#allocation2] sm:$0xff] %vm70, %v110
    %s113 = scalar_lea.vmem %s0, 16
    %v114 = vld [vmem:[%s113] sm:$0xff]
    %v115 = vld [vmem:[%s113 + $0x8] sm:$0xff]
    %116 = vmatpush.msra.mxu0 0.0
    %117 = vmatpush.msra.mxu0 0.0
    %118 = vmatpush.msra.mxu0 0.0
    %119 = vmatpush.msra.mxu0 0.0
    %120 = vmatpush.msra.mxu0 0.0
    %121 = vmatpush.msra.mxu0 0.0
    %122 = vmatpush.msra.mxu0 0.0
    %123 = vmatpush.msra.mxu0 0.0
    %124 = vmatpush.msra.mxu0 0.0
    %125 = vmatpush.msra.mxu0 0.0
    %126 = vmatpush.msra.mxu0 0.0
    %127 = vmatpush.msra.mxu0 0.0
    %128 = vmatpush.msra.mxu0 0.0
    %129 = vmatpush.msra.mxu0 0.0
    %130 = vmatpush.msra.mxu0 %v115
    %131 = vmatpush.msra.mxu0 %v114
    %132 = vmatmul.f32.gmra.mxu0 %v30
    %v133 = vpop.f32.mrf.mxu0
    %v134 = vadd.f32 0.0, %v133
    %135 = vmatmul.f32.gmra.mxu0 %v33
    %v136 = vpop.f32.mrf.mxu0
    %v137 = vadd.f32 0.0, %v136
    %138 = vmatmul.f32.gmra.mxu0 %v36
    %v139 = vpop.f32.mrf.mxu0
    %v140 = vadd.f32 0.0, %v139
    %141 = vmatmul.f32.gmra.mxu0 %v39
    %v142 = vpop.f32.mrf.mxu0
    %v143 = vadd.f32 0.0, %v142
    %144 = vdwg.mxu0
    %s145 = scalar_lea.vmem %s4, 32
    %146 = vst.msk [vmem:[%s145] sm:$0xff] %vm70, %v134
    %147 = vst.msk [vmem:[%s145 + $0x8] sm:$0xff] %vm70, %v137
    %148 = vst.msk [vmem:[%s145 + $0x10] sm:$0xff] %vm70, %v140
    %149 = vst.msk [vmem:[%s145 + $0x18] sm:$0xff] %vm70, %v143
    %v150 = vmul.f32 %v134, 0.2
    %v151 = vmul.f32 %v137, 0.2
    %v152 = vmul.f32 %v140, 0.2
    %v153 = vmul.f32 %v143, 0.2
    %v154 = vmax.f32 %v134, %v150
    %v155 = vmax.f32 %v137, %v151
    %v156 = vmax.f32 %v140, %v152
    %v157 = vmax.f32 %v143, %v153
    %158 = vmatpush.msra.mxu0 0.0
    %159 = vmatpush.msra.mxu0 0.0
    %160 = vmatpush.msra.mxu0 0.0
    %161 = vmatpush.msra.mxu0 0.0
    %162 = vmatpush.msra.mxu0 0.0
    %163 = vmatpush.msra.mxu0 0.0
    %164 = vmatpush.msra.mxu0 0.0
    %165 = vmatpush.msra.mxu0 0.0
    %166 = vmatpush.msra.mxu0 0.0
    %167 = vmatpush.msra.mxu0 0.0
    %168 = vmatpush.msra.mxu0 0.0
    %169 = vmatpush.msra.mxu0 0.0
    %170 = vmatpush.msra.mxu0 %v157
    %171 = vmatpush.msra.mxu0 %v156
    %172 = vmatpush.msra.mxu0 %v155
    %173 = vmatpush.msra.mxu0 %v154
    %174 = vmatmul.f32.gmra.mxu0 %v90
    %v175 = vpop.f32.mrf.mxu0
    %v176 = vadd.f32 %v86, %v175
    %177 = vdwg.mxu0
    %s178 = scalar_lea.vmem [#allocation2], 8
    %179 = vst.msk [vmem:[%s178] sm:$0xff] %vm70, %v176
    // Predicated region
    $region18: #{netc1_forward.1} parent=1 // pred_check
      _
    $region19: #{netc1_forward.1} parent=1 // pred_check_branch
      %181 = sbr.rel (0) target = $region21
    $region20: #{netc1_forward.1} parent=1 // pred_region
      _
    $region21: #{netc1_forward.1} parent=1 // pred_fallthru
      _
    // Predicated region
    $region22: #{netc1_forward.1} parent=1 // pred_check
      _
    $region23: #{netc1_forward.1} parent=1 // pred_check_branch
      %183 = sbr.rel (0) target = $region25
    $region24: #{netc1_forward.1} parent=1 // pred_region
      %185 = vsyncadd [#allocation3], 0
      %s186 = sshll.u32 [#allocation2], 4
      %s187 = int_to_ptr.vmem [resolvable:$true] %s186
      %s188 = sshll.u32 %s5, 4
      %s189 = int_to_ptr.hbm [resolvable:$true] %s188
      %194 = dma.vmem_to_hbm [thread:$0]  %s187, 256, %s189, [#allocation3], 128, 128, 8
    $region25: #{netc1_forward.1} parent=1 // pred_fallthru
      _
    // Predicated region
    $region26: #{netc1_forward.1} parent=1 // pred_check
      _
    $region27: #{netc1_forward.1} parent=1 // pred_check_branch
      %196 = sbr.rel (0) target = $region29
    $region28: #{netc1_forward.1} parent=1 // pred_region
      _
    $region29: #{netc1_forward.1} parent=1 // pred_fallthru
      _
    // Predicated region
    $region30: #{netc1_forward.1} parent=1 // pred_check
      _
    $region31: #{netc1_forward.1} parent=1 // pred_check_branch
      %198 = sbr.rel (0) target = $region33
    $region32: #{netc1_forward.1} parent=1 // pred_region
      %200 = dma.done [#allocation3], 256
    $region33: #{netc1_forward.1} parent=1 // pred_fallthru
      _
    %201 = vsyncpa [#allocation3], 1

</llo_original>
